<compile_context>
chip_gen: v7x
topology: tpu7x:2x2x1
jax: 0.10.0
libtpu: 0.0.40
codegen_flags: <defaults>
</compile_context>

<pallas_src>
import jax
import jax.numpy as jnp
from jax.experimental import pallas as pl
from jax.experimental.pallas import tpu as pltpu

CONFIG = dict(layer1_size=32, layer2_size=32, layer3_size=16, layer4_size=0,
              batch_norm=True, dropout_rate=0.1)
INPUT_SIZE = 8
BN_EPS = 1e-5


def _round_up(x, m):
    return ((x + m - 1) // m) * m


def _make_mlp_kernel(n_hidden):
    """Fused MLP in batch-on-lanes layout.

    Activations h are (features, batch_tile): features on sublanes, batch on lanes.
    Each hidden layer computes h <- relu(Wt @ h + b) with BN pre-folded into Wt/b;
    the final layer is linear only.  Dropout is eval-mode identity.
    """
    def kernel(*refs):
        x_ref, o_ref = refs[0], refs[-1]
        h = x_ref[...]                                                  # (in_f, tile_b)
        for i in range(n_hidden):
            w_ref, b_ref = refs[1 + 2 * i], refs[2 + 2 * i]
            z = jnp.dot(w_ref[...], h,
                        preferred_element_type=jnp.float32) + b_ref[...]
            h = jnp.maximum(z, 0.0)
        wo_ref, bo_ref = refs[1 + 2 * n_hidden], refs[2 + 2 * n_hidden]
        o_ref[...] = jnp.dot(wo_ref[...], h,
                             preferred_element_type=jnp.float32) + bo_ref[...]
    return kernel


def init_params(key, config):
    """Deterministic parameter init mirroring fresh nn.Linear / nn.BatchNorm1d."""
    sizes = [s for s in (config['layer1_size'], config['layer2_size'],
                         config['layer3_size'], config['layer4_size']) if s > 0]
    params = []
    in_f = INPUT_SIZE
    for out_f in sizes:
        key, kw, kb = jax.random.split(key, 3)
        bound = 1.0 / jnp.sqrt(jnp.float32(in_f))
        w = jax.random.uniform(kw, (in_f, out_f), jnp.float32, -bound, bound)
        b = jax.random.uniform(kb, (out_f,), jnp.float32, -bound, bound)
        gamma = jnp.ones((out_f,), jnp.float32)
        beta = jnp.zeros((out_f,), jnp.float32)
        run_mean = jnp.zeros((out_f,), jnp.float32)
        run_var = jnp.ones((out_f,), jnp.float32)
        params.extend([w, b, gamma, beta, run_mean, run_var])
        in_f = out_f
    key, kw, kb = jax.random.split(key, 3)
    bound = 1.0 / jnp.sqrt(jnp.float32(in_f))
    wo = jax.random.uniform(kw, (in_f, 1), jnp.float32, -bound, bound)
    bo = jax.random.uniform(kb, (1,), jnp.float32, -bound, bound)
    params.extend([wo, bo])
    return params


def prepare_kernel_params(params):
    """Fold eval-mode BatchNorm into the Linears and transpose to (out, in) layout."""
    n_hidden = (len(params) - 2) // 6
    kparams = []
    for i in range(n_hidden):
        w, b, g, be, rm, rv = params[6 * i:6 * i + 6]
        scale = g * jax.lax.rsqrt(rv + BN_EPS)        # (out,)
        w_fold = w * scale[None, :]                   # (in, out)
        b_fold = (b - rm) * scale + be                # (out,)
        kparams.append(w_fold.T)                      # (out, in)  -> Wt @ h
        kparams.append(b_fold[:, None])               # (out, 1)   broadcast over lanes
    wo, bo = params[-2], params[-1]
    kparams.append(wo.T)                              # (1, in)
    kparams.append(bo[:, None])                       # (1, 1)
    return kparams


@jax.jit
def california_nn_forward(x, kparams):
    batch = x.shape[0]
    n_hidden = (len(kparams) - 2) // 2

    # Batch rides the 128-lane axis; tile it (512-2048 lanes is the HBM-roofline
    # sweet spot, small-batch cases collapse to a single 128-lane tile).
    tile_b = min(2048, _round_up(batch, 128))
    padded = _round_up(batch, tile_b)
    xt = jnp.pad(x.T, ((0, 0), (0, padded - batch)))  # (8, padded)  lane-dense
    grid = (padded // tile_b,)

    in_specs = [pl.BlockSpec((INPUT_SIZE, tile_b), lambda i: (0, i))]
    for p in kparams:
        # Full-array blocks with constant index_map -> weights stay VMEM-resident
        # across all grid steps (DMA'd once).
        in_specs.append(pl.BlockSpec(p.shape, lambda i: (0, 0)))

    out = pl.pallas_call(
        _make_mlp_kernel(n_hidden),
        out_shape=jax.ShapeDtypeStruct((1, padded), jnp.float32),
        grid=grid,
        in_specs=in_specs,
        out_specs=pl.BlockSpec((1, tile_b), lambda i: (0, i)),
        compiler_params=pltpu.CompilerParams(
            dimension_semantics=("parallel",)),
    )(xt, *kparams)

    # Back to the module's (batch, 1) convention outside the kernel.
    return out[0, :batch].reshape(batch, 1)


def reference_forward(x, params):
    """Plain-JAX reference of the eval-mode forward (un-folded BN)."""
    h = x
    n_hidden = (len(params) - 2) // 6
    for i in range(n_hidden):
        w, b, g, be, rm, rv = params[6 * i:6 * i + 6]
        z = h @ w + b
        z = (z - rm) * (g / jnp.sqrt(rv + BN_EPS)) + be
        h = jnp.maximum(z, 0.0)
    wo, bo = params[-2], params[-1]
    return h @ wo + bo


if __name__ == "__main__":
    key = jax.random.PRNGKey(0)
    key, kx = jax.random.split(key)
    batch = 8
    x = jax.random.normal(kx, (batch, INPUT_SIZE), jnp.float32)

    params = init_params(key, CONFIG)
    kparams = prepare_kernel_params(params)

    out = california_nn_forward(x, kparams)
    out = jax.block_until_ready(out)

    ref = reference_forward(x, params)
    assert out.shape == (batch, 1), out.shape
    assert jnp.allclose(out, ref, atol=1e-4, rtol=1e-4), (out, ref)

    print("KERNEL_OK")
</pallas_src>

<mosaic_0001>
module attributes {stable_mosaic.version = 11 : i64} {
  func.func @kernel(%arg0: i32, %arg1: memref<8x128xf32, #tpu.memory_space<vmem>>, %arg2: memref<32x8xf32, #tpu.memory_space<vmem>>, %arg3: memref<32x1xf32, #tpu.memory_space<vmem>>, %arg4: memref<32x32xf32, #tpu.memory_space<vmem>>, %arg5: memref<32x1xf32, #tpu.memory_space<vmem>>, %arg6: memref<16x32xf32, #tpu.memory_space<vmem>>, %arg7: memref<16x1xf32, #tpu.memory_space<vmem>>, %arg8: memref<1x16xf32, #tpu.memory_space<vmem>>, %arg9: memref<1x1xf32, #tpu.memory_space<vmem>>, %arg10: memref<1x128xf32, #tpu.memory_space<vmem>>) attributes {dimension_semantics = [#tpu.dimension_semantics<parallel>], iteration_bounds = array<i64: 1>, scalar_prefetch = 0 : i64, scratch_operands = 0 : i64, tpu.core_type = #tpu.core_type<tc>, window_params = [{transform_indices = @transform_0, window_bounds = array<i64: 8, 128>}, {pipeline_mode = #tpu.pipeline_mode<synchronous>, transform_indices = @transform_1, window_bounds = array<i64: 32, 8>}, {pipeline_mode = #tpu.pipeline_mode<synchronous>, transform_indices = @transform_2, window_bounds = array<i64: 32, 1>}, {pipeline_mode = #tpu.pipeline_mode<synchronous>, transform_indices = @transform_3, window_bounds = array<i64: 32, 32>}, {pipeline_mode = #tpu.pipeline_mode<synchronous>, transform_indices = @transform_4, window_bounds = array<i64: 32, 1>}, {pipeline_mode = #tpu.pipeline_mode<synchronous>, transform_indices = @transform_5, window_bounds = array<i64: 16, 32>}, {pipeline_mode = #tpu.pipeline_mode<synchronous>, transform_indices = @transform_6, window_bounds = array<i64: 16, 1>}, {pipeline_mode = #tpu.pipeline_mode<synchronous>, transform_indices = @transform_7, window_bounds = array<i64: 1, 16>}, {pipeline_mode = #tpu.pipeline_mode<synchronous>, transform_indices = @transform_8, window_bounds = array<i64: 1, 1>}, {transform_indices = @transform_9, window_bounds = array<i64: 1, 128>}]} {
    %c0 = arith.constant 0 : index
    %c0_0 = arith.constant 0 : index
    %0 = vector.load %arg1[%c0, %c0_0] : memref<8x128xf32, #tpu.memory_space<vmem>>, vector<8x128xf32>
    %c0_1 = arith.constant 0 : index
    %c0_2 = arith.constant 0 : index
    %1 = vector.load %arg2[%c0_1, %c0_2] : memref<32x8xf32, #tpu.memory_space<vmem>>, vector<32x8xf32>
    %cst = arith.constant dense<0.000000e+00> : vector<32x128xf32>
    %2 = tpu.matmul %1, %0, %cst {dimension_numbers = #tpu.dot_dimension_numbers<[1], [0], [0], [1], [0, 0, 1, 1], [], []>} : vector<32x8xf32>, vector<8x128xf32>, vector<32x128xf32> -> vector<32x128xf32>
    %c0_3 = arith.constant 0 : index
    %c0_4 = arith.constant 0 : index
    %3 = vector.load %arg3[%c0_3, %c0_4] : memref<32x1xf32, #tpu.memory_space<vmem>>, vector<32x1xf32>
    %4 = vector.broadcast %3 : vector<32x1xf32> to vector<32x128xf32>
    %5 = arith.addf %2, %4 : vector<32x128xf32>
    %cst_5 = arith.constant 0.000000e+00 : f32
    %6 = vector.broadcast %cst_5 : f32 to vector<32x128xf32>
    %7 = arith.maximumf %5, %6 : vector<32x128xf32>
    %c0_6 = arith.constant 0 : index
    %c0_7 = arith.constant 0 : index
    %8 = vector.load %arg4[%c0_6, %c0_7] : memref<32x32xf32, #tpu.memory_space<vmem>>, vector<32x32xf32>
    %cst_8 = arith.constant dense<0.000000e+00> : vector<32x128xf32>
    %9 = tpu.matmul %8, %7, %cst_8 {dimension_numbers = #tpu.dot_dimension_numbers<[1], [0], [0], [1], [0, 0, 1, 1], [], []>} : vector<32x32xf32>, vector<32x128xf32>, vector<32x128xf32> -> vector<32x128xf32>
    %c0_9 = arith.constant 0 : index
    %c0_10 = arith.constant 0 : index
    %10 = vector.load %arg5[%c0_9, %c0_10] : memref<32x1xf32, #tpu.memory_space<vmem>>, vector<32x1xf32>
    %11 = vector.broadcast %10 : vector<32x1xf32> to vector<32x128xf32>
    %12 = arith.addf %9, %11 : vector<32x128xf32>
    %cst_11 = arith.constant 0.000000e+00 : f32
    %13 = vector.broadcast %cst_11 : f32 to vector<32x128xf32>
    %14 = arith.maximumf %12, %13 : vector<32x128xf32>
    %c0_12 = arith.constant 0 : index
    %c0_13 = arith.constant 0 : index
    %15 = vector.load %arg6[%c0_12, %c0_13] : memref<16x32xf32, #tpu.memory_space<vmem>>, vector<16x32xf32>
    %cst_14 = arith.constant dense<0.000000e+00> : vector<16x128xf32>
    %16 = tpu.matmul %15, %14, %cst_14 {dimension_numbers = #tpu.dot_dimension_numbers<[1], [0], [0], [1], [0, 0, 1, 1], [], []>} : vector<16x32xf32>, vector<32x128xf32>, vector<16x128xf32> -> vector<16x128xf32>
    %c0_15 = arith.constant 0 : index
    %c0_16 = arith.constant 0 : index
    %17 = vector.load %arg7[%c0_15, %c0_16] : memref<16x1xf32, #tpu.memory_space<vmem>>, vector<16x1xf32>
    %18 = vector.broadcast %17 : vector<16x1xf32> to vector<16x128xf32>
    %19 = arith.addf %16, %18 : vector<16x128xf32>
    %cst_17 = arith.constant 0.000000e+00 : f32
    %20 = vector.broadcast %cst_17 : f32 to vector<16x128xf32>
    %21 = arith.maximumf %19, %20 : vector<16x128xf32>
    %c0_18 = arith.constant 0 : index
    %c0_19 = arith.constant 0 : index
    %22 = vector.load %arg8[%c0_18, %c0_19] : memref<1x16xf32, #tpu.memory_space<vmem>>, vector<1x16xf32>
    %cst_20 = arith.constant dense<0.000000e+00> : vector<1x128xf32>
    %23 = tpu.matmul %22, %21, %cst_20 {dimension_numbers = #tpu.dot_dimension_numbers<[1], [0], [0], [1], [0, 0, 1, 1], [], []>} : vector<1x16xf32>, vector<16x128xf32>, vector<1x128xf32> -> vector<1x128xf32>
    %c0_21 = arith.constant 0 : index
    %c0_22 = arith.constant 0 : index
    %24 = vector.load %arg9[%c0_21, %c0_22] : memref<1x1xf32, #tpu.memory_space<vmem>>, vector<1x1xf32>
    %25 = vector.broadcast %24 : vector<1x1xf32> to vector<1x128xf32>
    %26 = arith.addf %23, %25 : vector<1x128xf32>
    %c0_23 = arith.constant 0 : index
    %c0_24 = arith.constant 0 : index
    %27 = vector.load %arg10[%c0_23, %c0_24] : memref<1x128xf32, #tpu.memory_space<vmem>>, vector<1x128xf32>
    tpu.vector_store %arg10[%c0_23, %c0_24], %26 {strides = array<i32>} : memref<1x128xf32, #tpu.memory_space<vmem>>, vector<1x128xf32>,
    return
  }
  func.func @transform_0(%arg0: i32) -> (i32, i32) {
    %c0_i32 = arith.constant 0 : i32
    %c0_i32_0 = arith.constant 0 : i32
    return %c0_i32, %arg0 : i32, i32
  }
  func.func @transform_1(%arg0: i32) -> (i32, i32) {
    %c0_i32 = arith.constant 0 : i32
    %c0_i32_0 = arith.constant 0 : i32
    %c0_i32_1 = arith.constant 0 : i32
    return %c0_i32, %c0_i32_0 : i32, i32
  }
  func.func @transform_2(%arg0: i32) -> (i32, i32) {
    %c0_i32 = arith.constant 0 : i32
    %c0_i32_0 = arith.constant 0 : i32
    %c0_i32_1 = arith.constant 0 : i32
    return %c0_i32, %c0_i32_0 : i32, i32
  }
  func.func @transform_3(%arg0: i32) -> (i32, i32) {
    %c0_i32 = arith.constant 0 : i32
    %c0_i32_0 = arith.constant 0 : i32
    %c0_i32_1 = arith.constant 0 : i32
    return %c0_i32, %c0_i32_0 : i32, i32
  }
  func.func @transform_4(%arg0: i32) -> (i32, i32) {
    %c0_i32 = arith.constant 0 : i32
    %c0_i32_0 = arith.constant 0 : i32
    %c0_i32_1 = arith.constant 0 : i32
    return %c0_i32, %c0_i32_0 : i32, i32
  }
  func.func @transform_5(%arg0: i32) -> (i32, i32) {
    %c0_i32 = arith.constant 0 : i32
    %c0_i32_0 = arith.constant 0 : i32
    %c0_i32_1 = arith.constant 0 : i32
    return %c0_i32, %c0_i32_0 : i32, i32
  }
  func.func @transform_6(%arg0: i32) -> (i32, i32) {
    %c0_i32 = arith.constant 0 : i32
    %c0_i32_0 = arith.constant 0 : i32
    %c0_i32_1 = arith.constant 0 : i32
    return %c0_i32, %c0_i32_0 : i32, i32
  }
  func.func @transform_7(%arg0: i32) -> (i32, i32) {
    %c0_i32 = arith.constant 0 : i32
    %c0_i32_0 = arith.constant 0 : i32
    %c0_i32_1 = arith.constant 0 : i32
    return %c0_i32, %c0_i32_0 : i32, i32
  }
  func.func @transform_8(%arg0: i32) -> (i32, i32) {
    %c0_i32 = arith.constant 0 : i32
    %c0_i32_0 = arith.constant 0 : i32
    %c0_i32_1 = arith.constant 0 : i32
    return %c0_i32, %c0_i32_0 : i32, i32
  }
  func.func @transform_9(%arg0: i32) -> (i32, i32) {
    %c0_i32 = arith.constant 0 : i32
    %c0_i32_0 = arith.constant 0 : i32
    return %c0_i32, %arg0 : i32, i32
  }
}

</mosaic_0001>

<llo_original>
// kernel: california_nn_forward.1
$region0: #{california_nn_forward.1}
  #allocation0 [shape = 'u32[]', space=smem, size = 0x4, offset = 0x4, fixed_abs, tag = 'smem constant byte address 0x4 - core index']
  #allocation1 [shape = 'u32[144,128]{1,0:T(1,128)}', space=vmem, size = 0x12000, scoped, tag = 'internal scratch']
  #allocation2 [shape = 'f32[1,1]{1,0:T(1,128)S(1)}', space=vmem, size = 0x200, scoped, tag = 'scoped memory for california_nn_forward.1']
  %s0 = inlined_call_operand.vmem [shape: f32[8,128], index: 0, kind: input, shape index: {}]
  %s1 = inlined_call_operand.vmem [shape: f32[32,8], index: 1, kind: input, shape index: {}]
  %s2 = inlined_call_operand.vmem [shape: f32[32,1], index: 2, kind: input, shape index: {}]
  %s3 = inlined_call_operand.vmem [shape: f32[32,32], index: 3, kind: input, shape index: {}]
  %s4 = inlined_call_operand.vmem [shape: f32[32,1], index: 4, kind: input, shape index: {}]
  %s5 = inlined_call_operand.vmem [shape: f32[16,32], index: 5, kind: input, shape index: {}]
  %s6 = inlined_call_operand.vmem [shape: f32[16,1], index: 6, kind: input, shape index: {}]
  %s7 = inlined_call_operand.vmem [shape: f32[1,16], index: 7, kind: input, shape index: {}]
  %s8 = inlined_call_operand.<no memory space> [shape: f32[1,1], index: 8, kind: input, shape index: {}]
  %s9 = inlined_call_operand.vmem [shape: f32[1,128], index: 9, kind: output, shape index: {}]
  %s10 = sld [smem:[#allocation0]]
  $region46: #{california_nn_forward.1} parent=0
    _
  %s12 = ssub.s32 1, %s10
  %s13 = scalar_select 0, %s12, %s10
  %v14 = vstv %s8
  %15 = vst [vmem:[#allocation2] sm:$0x1] %v14
  // Predicated region
  $region2: #{california_nn_forward.1} parent=0 // pred_check
    _
  $region3: #{california_nn_forward.1} parent=0 // pred_check_branch
    %17 = sbr.rel (0) target = $region5
  $region4: #{california_nn_forward.1} parent=0 // pred_region
    _
  $region5: #{california_nn_forward.1} parent=0 // pred_fallthru
    _
  // Predicated region
  $region6: #{california_nn_forward.1} parent=0 // pred_check
    _
  $region7: #{california_nn_forward.1} parent=0 // pred_check_branch
    %19 = sbr.rel (0) target = $region9
  $region8: #{california_nn_forward.1} parent=0 // pred_region
    _
  $region9: #{california_nn_forward.1} parent=0 // pred_fallthru
    _
  // Predicated region
  $region10: #{california_nn_forward.1} parent=0 // pred_check
    _
  $region11: #{california_nn_forward.1} parent=0 // pred_check_branch
    %21 = sbr.rel (0) target = $region13
  $region12: #{california_nn_forward.1} parent=0 // pred_region
    _
  $region13: #{california_nn_forward.1} parent=0 // pred_fallthru
    _
  // Predicated region
  $region14: #{california_nn_forward.1} parent=0 // pred_check
    _
  $region15: #{california_nn_forward.1} parent=0 // pred_check_branch
    %23 = sbr.rel (0) target = $region17
  $region16: #{california_nn_forward.1} parent=0 // pred_region
    _
  $region17: #{california_nn_forward.1} parent=0 // pred_fallthru
    _
  // Predicated region
  $region18: #{california_nn_forward.1} parent=0 // pred_check
    _
  $region19: #{california_nn_forward.1} parent=0 // pred_check_branch
    %25 = sbr.rel (0) target = $region21
  $region20: #{california_nn_forward.1} parent=0 // pred_region
    _
  $region21: #{california_nn_forward.1} parent=0 // pred_fallthru
    _
  // Predicated region
  $region22: #{california_nn_forward.1} parent=0 // pred_check
    _
  $region23: #{california_nn_forward.1} parent=0 // pred_check_branch
    %27 = sbr.rel (0) target = $region25
  $region24: #{california_nn_forward.1} parent=0 // pred_region
    _
  $region25: #{california_nn_forward.1} parent=0 // pred_fallthru
    _
  // Predicated region
  $region26: #{california_nn_forward.1} parent=0 // pred_check
    _
  $region27: #{california_nn_forward.1} parent=0 // pred_check_branch
    %29 = sbr.rel (0) target = $region29
  $region28: #{california_nn_forward.1} parent=0 // pred_region
    _
  $region29: #{california_nn_forward.1} parent=0 // pred_fallthru
    _
  // Predicated region
  $region30: #{california_nn_forward.1} parent=0 // pred_check
    _
  $region31: #{california_nn_forward.1} parent=0 // pred_check_branch
    %31 = sbr.rel (0) target = $region33
  $region32: #{california_nn_forward.1} parent=0 // pred_region
    _
  $region33: #{california_nn_forward.1} parent=0 // pred_fallthru
    _
  // Predicated region
  $region34: #{california_nn_forward.1} parent=0 // pred_check
    _
  $region35: #{california_nn_forward.1} parent=0 // pred_check_branch
    %33 = sbr.rel (0) target = $region37
  $region36: #{california_nn_forward.1} parent=0 // pred_region
    _
  $region37: #{california_nn_forward.1} parent=0 // pred_fallthru
    _
  %v34 = vld [vmem:[%s0] sm:$0xff]
  %v35 = vld [vmem:[%s1] sm:$0xff]
  %v36 = vld [vmem:[%s1 + $0x8] sm:$0xff]
  %v37 = vld [vmem:[%s1 + $0x10] sm:$0xff]
  %v38 = vld [vmem:[%s1 + $0x18] sm:$0xff]
  %v39 = vld [vmem:[%s2] sm:$0xff]
  %v40 = vld [vmem:[%s2 + $0x8] sm:$0xff]
  %v41 = vld [vmem:[%s2 + $0x10] sm:$0xff]
  %v42 = vld [vmem:[%s2 + $0x18] sm:$0xff]
  %44 = vset.pattern.permute.xlu0 0
  %45 = vperm.xlu0 %44, %v39
  %v46 = vpop.permute.xlu0 %45
  %49 = vset.pattern.permute.xlu0 0
  %50 = vperm.xlu0 %49, %v40
  %v51 = vpop.permute.xlu0 %50
  %54 = vset.pattern.permute.xlu0 0
  %55 = vperm.xlu0 %54, %v41
  %v56 = vpop.permute.xlu0 %55
  %59 = vset.pattern.permute.xlu0 0
  %60 = vperm.xlu0 %59, %v42
  %v61 = vpop.permute.xlu0 %60
  %vm63 = vcmask 64512
  %v65 = vsel %vm63, %v35, 0
  %v68 = vsel %vm63, %v36, 0
  %v71 = vsel %vm63, %v37, 0
  %v74 = vsel %vm63, %v38, 0
  %76 = vmatprep.subr.mxu0 0.0
  %77 = vmatpush1.msra.mxu0 %v34
  %78 = vmatprep.subr.mxu0 0.0
  %79 = vmatpush1.msra.mxu0 0.0
  %80 = vmatprep.subr.mxu0 0.0
  %81 = vmatpush1.msra.mxu0 0.0
  %82 = vmatprep.subr.mxu0 0.0
  %83 = vmatpush1.msra.mxu0 0.0
  %84 = vmatprep.subr.mxu0 0.0
  %85 = vmatpush1.msra.mxu0 0.0
  %86 = vmatprep.subr.mxu0 0.0
  %87 = vmatpush1.msra.mxu0 0.0
  %88 = vmatprep.subr.mxu0 0.0
  %89 = vmatpush1.msra.mxu0 0.0
  %90 = vmatprep.subr.mxu0 0.0
  %91 = vmatpush1.msra.mxu0 0.0
  %92 = vmatprep.subr.mxu0 0.0
  %93 = vmatpush1.msra.mxu0 0.0
  %94 = vmatprep.subr.mxu0 0.0
  %95 = vmatpush1.msra.mxu0 0.0
  %96 = vmatprep.subr.mxu0 0.0
  %97 = vmatpush1.msra.mxu0 0.0
  %98 = vmatprep.subr.mxu0 0.0
  %99 = vmatpush1.msra.mxu0 0.0
  %100 = vmatprep.subr.mxu0 0.0
  %101 = vmatpush1.msra.mxu0 0.0
  %102 = vmatprep.subr.mxu0 0.0
  %103 = vmatpush1.msra.mxu0 0.0
  %104 = vmatprep.subr.mxu0 0.0
  %105 = vmatpush1.msra.mxu0 0.0
  %106 = vmatprep.subr.mxu0 0.0
  %107 = vmatpush1.msra.mxu0 0.0
  %108 = vmatprep.subr.mxu0 0.0
  %109 = vmatpush1.msra.mxu0 0.0
  %110 = vmatprep.subr.mxu0 0.0
  %111 = vmatpush1.msra.mxu0 0.0
  %112 = vmatprep.subr.mxu0 0.0
  %113 = vmatpush1.msra.mxu0 0.0
  %114 = vmatprep.subr.mxu0 0.0
  %115 = vmatpush1.msra.mxu0 0.0
  %116 = vmatprep.subr.mxu0 0.0
  %117 = vmatpush1.msra.mxu0 0.0
  %118 = vmatprep.subr.mxu0 0.0
  %119 = vmatpush1.msra.mxu0 0.0
  %120 = vmatprep.subr.mxu0 0.0
  %121 = vmatpush1.msra.mxu0 0.0
  %122 = vmatprep.subr.mxu0 0.0
  %123 = vmatpush1.msra.mxu0 0.0
  %124 = vmatprep.subr.mxu0 0.0
  %125 = vmatpush1.msra.mxu0 0.0
  %126 = vmatprep.subr.mxu0 0.0
  %127 = vmatpush1.msra.mxu0 0.0
  %128 = vmatprep.subr.mxu0 0.0
  %129 = vmatpush1.msra.mxu0 0.0
  %130 = vmatprep.subr.mxu0 0.0
  %131 = vmatpush1.msra.mxu0 0.0
  %132 = vmatprep.subr.mxu0 0.0
  %133 = vmatpush1.msra.mxu0 0.0
  %134 = vmatprep.subr.mxu0 0.0
  %135 = vmatpush1.msra.mxu0 0.0
  %136 = vmatprep.subr.mxu0 0.0
  %137 = vmatpush1.msra.mxu0 0.0
  %138 = vmatprep.subr.mxu0 0.0
  %139 = vmatpush1.msra.mxu0 0.0
  %140 = vmatprep.mubr.f32.mxu0 0.0
  %141 = vmatmul.mubr.f32.gmra.mrb[0].mxu0 %v65
  %v142 = vpop.f32.mrb[0].mxu0
  %v143 = vadd.f32 %v46, %v142
  %v144 = vpop.f32.mrb[0].mxu0
  %145 = vmatprep.mubr.f32.mxu0 0.0
  %146 = vmatmul.mubr.f32.gmra.mrb[0].mxu0 %v68
  %v147 = vpop.f32.mrb[0].mxu0
  %v148 = vadd.f32 %v51, %v147
  %v149 = vpop.f32.mrb[0].mxu0
  %150 = vmatprep.mubr.f32.mxu0 0.0
  %151 = vmatmul.mubr.f32.gmra.mrb[0].mxu0 %v71
  %v152 = vpop.f32.mrb[0].mxu0
  %v153 = vadd.f32 %v56, %v152
  %v154 = vpop.f32.mrb[0].mxu0
  %155 = vmatprep.mubr.f32.mxu0 0.0
  %156 = vmatmul.mubr.f32.gmra.mrb[0].mxu0 %v74
  %v157 = vpop.f32.mrb[0].mxu0
  %v158 = vadd.f32 %v61, %v157
  %v159 = vpop.f32.mrb[0].mxu0
  %160 = vdwg.mxu0
  %v161 = vmax.f32 %v143, 0.0
  %v162 = vmax.f32 %v148, 0.0
  %v163 = vmax.f32 %v153, 0.0
  %v164 = vmax.f32 %v158, 0.0
  %v165 = vld [vmem:[%s3] sm:$0xff]
  %v166 = vld [vmem:[%s3 + $0x8] sm:$0xff]
  %v167 = vld [vmem:[%s3 + $0x10] sm:$0xff]
  %v168 = vld [vmem:[%s3 + $0x18] sm:$0xff]
  %v169 = vld [vmem:[%s4] sm:$0xff]
  %v170 = vld [vmem:[%s4 + $0x8] sm:$0xff]
  %v171 = vld [vmem:[%s4 + $0x10] sm:$0xff]
  %v172 = vld [vmem:[%s4 + $0x18] sm:$0xff]
  %174 = vset.pattern.permute.xlu0 0
  %175 = vperm.xlu0 %174, %v169
  %v176 = vpop.permute.xlu0 %175
  %179 = vset.pattern.permute.xlu0 0
  %180 = vperm.xlu0 %179, %v170
  %v181 = vpop.permute.xlu0 %180
  %184 = vset.pattern.permute.xlu0 0
  %185 = vperm.xlu0 %184, %v171
  %v186 = vpop.permute.xlu0 %185
  %189 = vset.pattern.permute.xlu0 0
  %190 = vperm.xlu0 %189, %v172
  %v191 = vpop.permute.xlu0 %190
  %vm193 = vcmask 261120
  %v195 = vsel %vm193, %v165, 0
  %v198 = vsel %vm193, %v166, 0
  %v201 = vsel %vm193, %v167, 0
  %v204 = vsel %vm193, %v168, 0
  %206 = vmatprep.subr.mxu0 0.0
  %207 = vmatpush1.msra.mxu0 %v161
  %208 = vmatprep.subr.mxu0 0.0
  %209 = vmatpush1.msra.mxu0 %v162
  %210 = vmatprep.subr.mxu0 0.0
  %211 = vmatpush1.msra.mxu0 %v163
  %212 = vmatprep.subr.mxu0 0.0
  %213 = vmatpush1.msra.mxu0 %v164
  %214 = vmatprep.subr.mxu0 0.0
  %215 = vmatpush1.msra.mxu0 0.0
  %216 = vmatprep.subr.mxu0 0.0
  %217 = vmatpush1.msra.mxu0 0.0
  %218 = vmatprep.subr.mxu0 0.0
  %219 = vmatpush1.msra.mxu0 0.0
  %220 = vmatprep.subr.mxu0 0.0
  %221 = vmatpush1.msra.mxu0 0.0
  %222 = vmatprep.subr.mxu0 0.0
  %223 = vmatpush1.msra.mxu0 0.0
  %224 = vmatprep.subr.mxu0 0.0
  %225 = vmatpush1.msra.mxu0 0.0
  %226 = vmatprep.subr.mxu0 0.0
  %227 = vmatpush1.msra.mxu0 0.0
  %228 = vmatprep.subr.mxu0 0.0
  %229 = vmatpush1.msra.mxu0 0.0
  %230 = vmatprep.subr.mxu0 0.0
  %231 = vmatpush1.msra.mxu0 0.0
  %232 = vmatprep.subr.mxu0 0.0
  %233 = vmatpush1.msra.mxu0 0.0
  %234 = vmatprep.subr.mxu0 0.0
  %235 = vmatpush1.msra.mxu0 0.0
  %236 = vmatprep.subr.mxu0 0.0
  %237 = vmatpush1.msra.mxu0 0.0
  %238 = vmatprep.subr.mxu0 0.0
  %239 = vmatpush1.msra.mxu0 0.0
  %240 = vmatprep.subr.mxu0 0.0
  %241 = vmatpush1.msra.mxu0 0.0
  %242 = vmatprep.subr.mxu0 0.0
  %243 = vmatpush1.msra.mxu0 0.0
  %244 = vmatprep.subr.mxu0 0.0
  %245 = vmatpush1.msra.mxu0 0.0
  %246 = vmatprep.subr.mxu0 0.0
  %247 = vmatpush1.msra.mxu0 0.0
  %248 = vmatprep.subr.mxu0 0.0
  %249 = vmatpush1.msra.mxu0 0.0
  %250 = vmatprep.subr.mxu0 0.0
  %251 = vmatpush1.msra.mxu0 0.0
  %252 = vmatprep.subr.mxu0 0.0
  %253 = vmatpush1.msra.mxu0 0.0
  %254 = vmatprep.subr.mxu0 0.0
  %255 = vmatpush1.msra.mxu0 0.0
  %256 = vmatprep.subr.mxu0 0.0
  %257 = vmatpush1.msra.mxu0 0.0
  %258 = vmatprep.subr.mxu0 0.0
  %259 = vmatpush1.msra.mxu0 0.0
  %260 = vmatprep.subr.mxu0 0.0
  %261 = vmatpush1.msra.mxu0 0.0
  %262 = vmatprep.subr.mxu0 0.0
  %263 = vmatpush1.msra.mxu0 0.0
  %264 = vmatprep.subr.mxu0 0.0
  %265 = vmatpush1.msra.mxu0 0.0
  %266 = vmatprep.subr.mxu0 0.0
  %267 = vmatpush1.msra.mxu0 0.0
  %268 = vmatprep.subr.mxu0 0.0
  %269 = vmatpush1.msra.mxu0 0.0
  %270 = vmatprep.mubr.f32.mxu0 0.0
  %271 = vmatmul.mubr.f32.gmra.mrb[0].mxu0 %v195
  %v272 = vpop.f32.mrb[0].mxu0
  %v273 = vadd.f32 %v176, %v272
  %v274 = vpop.f32.mrb[0].mxu0
  %275 = vmatprep.mubr.f32.mxu0 0.0
  %276 = vmatmul.mubr.f32.gmra.mrb[0].mxu0 %v198
  %v277 = vpop.f32.mrb[0].mxu0
  %v278 = vadd.f32 %v181, %v277
  %v279 = vpop.f32.mrb[0].mxu0
  %280 = vmatprep.mubr.f32.mxu0 0.0
  %281 = vmatmul.mubr.f32.gmra.mrb[0].mxu0 %v201
  %v282 = vpop.f32.mrb[0].mxu0
  %v283 = vadd.f32 %v186, %v282
  %v284 = vpop.f32.mrb[0].mxu0
  %285 = vmatprep.mubr.f32.mxu0 0.0
  %286 = vmatmul.mubr.f32.gmra.mrb[0].mxu0 %v204
  %v287 = vpop.f32.mrb[0].mxu0
  %v288 = vadd.f32 %v191, %v287
  %v289 = vpop.f32.mrb[0].mxu0
  %290 = vdwg.mxu0
  %v291 = vmax.f32 %v273, 0.0
  %v292 = vmax.f32 %v278, 0.0
  %v293 = vmax.f32 %v283, 0.0
  %v294 = vmax.f32 %v288, 0.0
  %v295 = vld [vmem:[%s5] sm:$0xff]
  %v296 = vld [vmem:[%s5 + $0x8] sm:$0xff]
  %v297 = vld [vmem:[%s6] sm:$0xff]
  %v298 = vld [vmem:[%s6 + $0x8] sm:$0xff]
  %300 = vset.pattern.permute.xlu0 0
  %301 = vperm.xlu0 %300, %v297
  %v302 = vpop.permute.xlu0 %301
  %305 = vset.pattern.permute.xlu0 0
  %306 = vperm.xlu0 %305, %v298
  %v307 = vpop.permute.xlu0 %306
  %v310 = vsel %vm193, %v295, 0
  %v313 = vsel %vm193, %v296, 0
  %315 = vmatprep.subr.mxu0 0.0
  %316 = vmatpush1.msra.mxu0 %v291
  %317 = vmatprep.subr.mxu0 0.0
  %318 = vmatpush1.msra.mxu0 %v292
  %319 = vmatprep.subr.mxu0 0.0
  %320 = vmatpush1.msra.mxu0 %v293
  %321 = vmatprep.subr.mxu0 0.0
  %322 = vmatpush1.msra.mxu0 %v294
  %323 = vmatprep.subr.mxu0 0.0
  %324 = vmatpush1.msra.mxu0 0.0
  %325 = vmatprep.subr.mxu0 0.0
  %326 = vmatpush1.msra.mxu0 0.0
  %327 = vmatprep.subr.mxu0 0.0
  %328 = vmatpush1.msra.mxu0 0.0
  %329 = vmatprep.subr.mxu0 0.0
  %330 = vmatpush1.msra.mxu0 0.0
  %331 = vmatprep.subr.mxu0 0.0
  %332 = vmatpush1.msra.mxu0 0.0
  %333 = vmatprep.subr.mxu0 0.0
  %334 = vmatpush1.msra.mxu0 0.0
  %335 = vmatprep.subr.mxu0 0.0
  %336 = vmatpush1.msra.mxu0 0.0
  %337 = vmatprep.subr.mxu0 0.0
  %338 = vmatpush1.msra.mxu0 0.0
  %339 = vmatprep.subr.mxu0 0.0
  %340 = vmatpush1.msra.mxu0 0.0
  %341 = vmatprep.subr.mxu0 0.0
  %342 = vmatpush1.msra.mxu0 0.0
  %343 = vmatprep.subr.mxu0 0.0
  %344 = vmatpush1.msra.mxu0 0.0
  %345 = vmatprep.subr.mxu0 0.0
  %346 = vmatpush1.msra.mxu0 0.0
  %347 = vmatprep.subr.mxu0 0.0
  %348 = vmatpush1.msra.mxu0 0.0
  %349 = vmatprep.subr.mxu0 0.0
  %350 = vmatpush1.msra.mxu0 0.0
  %351 = vmatprep.subr.mxu0 0.0
  %352 = vmatpush1.msra.mxu0 0.0
  %353 = vmatprep.subr.mxu0 0.0
  %354 = vmatpush1.msra.mxu0 0.0
  %355 = vmatprep.subr.mxu0 0.0
  %356 = vmatpush1.msra.mxu0 0.0
  %357 = vmatprep.subr.mxu0 0.0
  %358 = vmatpush1.msra.mxu0 0.0
  %359 = vmatprep.subr.mxu0 0.0
  %360 = vmatpush1.msra.mxu0 0.0
  %361 = vmatprep.subr.mxu0 0.0
  %362 = vmatpush1.msra.mxu0 0.0
  %363 = vmatprep.subr.mxu0 0.0
  %364 = vmatpush1.msra.mxu0 0.0
  %365 = vmatprep.subr.mxu0 0.0
  %366 = vmatpush1.msra.mxu0 0.0
  %367 = vmatprep.subr.mxu0 0.0
  %368 = vmatpush1.msra.mxu0 0.0
  %369 = vmatprep.subr.mxu0 0.0
  %370 = vmatpush1.msra.mxu0 0.0
  %371 = vmatprep.subr.mxu0 0.0
  %372 = vmatpush1.msra.mxu0 0.0
  %373 = vmatprep.subr.mxu0 0.0
  %374 = vmatpush1.msra.mxu0 0.0
  %375 = vmatprep.subr.mxu0 0.0
  %376 = vmatpush1.msra.mxu0 0.0
  %377 = vmatprep.subr.mxu0 0.0
  %378 = vmatpush1.msra.mxu0 0.0
  %379 = vmatprep.mubr.f32.mxu0 0.0
  %380 = vmatmul.mubr.f32.gmra.mrb[0].mxu0 %v310
  %v381 = vpop.f32.mrb[0].mxu0
  %v382 = vadd.f32 %v302, %v381
  %v383 = vpop.f32.mrb[0].mxu0
  %384 = vmatprep.mubr.f32.mxu0 0.0
  %385 = vmatmul.mubr.f32.gmra.mrb[0].mxu0 %v313
  %v386 = vpop.f32.mrb[0].mxu0
  %v387 = vadd.f32 %v307, %v386
  %v388 = vpop.f32.mrb[0].mxu0
  %389 = vdwg.mxu0
  %v390 = vmax.f32 %v382, 0.0
  %v391 = vmax.f32 %v387, 0.0
  %v392 = vld [vmem:[%s7] sm:$0x1]
  %v393 = vld [vmem:[#allocation2] sm:$0x1]
  %395 = vset.pattern.permute.xlu0 0
  %396 = vperm.xlu0 %395, %v393
  %v397 = vpop.permute.xlu0 %396
  %v399 = vlaneseq
  %v400 = vshrl.u32 %v399, 7
  %v401 = vsub.s32 0, %v400
  %v402 = vrot.slane %v397, %v401
  %vm403 = vcmask 130048
  %v405 = vsel %vm403, %v392, 0
  %407 = vmatprep.subr.mxu0 0.0
  %408 = vmatpush1.msra.mxu0 %v390
  %409 = vmatprep.subr.mxu0 0.0
  %410 = vmatpush1.msra.mxu0 %v391
  %411 = vmatprep.subr.mxu0 0.0
  %412 = vmatpush1.msra.mxu0 0.0
  %413 = vmatprep.subr.mxu0 0.0
  %414 = vmatpush1.msra.mxu0 0.0
  %415 = vmatprep.subr.mxu0 0.0
  %416 = vmatpush1.msra.mxu0 0.0
  %417 = vmatprep.subr.mxu0 0.0
  %418 = vmatpush1.msra.mxu0 0.0
  %419 = vmatprep.subr.mxu0 0.0
  %420 = vmatpush1.msra.mxu0 0.0
  %421 = vmatprep.subr.mxu0 0.0
  %422 = vmatpush1.msra.mxu0 0.0
  %423 = vmatprep.subr.mxu0 0.0
  %424 = vmatpush1.msra.mxu0 0.0
  %425 = vmatprep.subr.mxu0 0.0
  %426 = vmatpush1.msra.mxu0 0.0
  %427 = vmatprep.subr.mxu0 0.0
  %428 = vmatpush1.msra.mxu0 0.0
  %429 = vmatprep.subr.mxu0 0.0
  %430 = vmatpush1.msra.mxu0 0.0
  %431 = vmatprep.subr.mxu0 0.0
  %432 = vmatpush1.msra.mxu0 0.0
  %433 = vmatprep.subr.mxu0 0.0
  %434 = vmatpush1.msra.mxu0 0.0
  %435 = vmatprep.subr.mxu0 0.0
  %436 = vmatpush1.msra.mxu0 0.0
  %437 = vmatprep.subr.mxu0 0.0
  %438 = vmatpush1.msra.mxu0 0.0
  %439 = vmatprep.subr.mxu0 0.0
  %440 = vmatpush1.msra.mxu0 0.0
  %441 = vmatprep.subr.mxu0 0.0
  %442 = vmatpush1.msra.mxu0 0.0
  %443 = vmatprep.subr.mxu0 0.0
  %444 = vmatpush1.msra.mxu0 0.0
  %445 = vmatprep.subr.mxu0 0.0
  %446 = vmatpush1.msra.mxu0 0.0
  %447 = vmatprep.subr.mxu0 0.0
  %448 = vmatpush1.msra.mxu0 0.0
  %449 = vmatprep.subr.mxu0 0.0
  %450 = vmatpush1.msra.mxu0 0.0
  %451 = vmatprep.subr.mxu0 0.0
  %452 = vmatpush1.msra.mxu0 0.0
  %453 = vmatprep.subr.mxu0 0.0
  %454 = vmatpush1.msra.mxu0 0.0
  %455 = vmatprep.subr.mxu0 0.0
  %456 = vmatpush1.msra.mxu0 0.0
  %457 = vmatprep.subr.mxu0 0.0
  %458 = vmatpush1.msra.mxu0 0.0
  %459 = vmatprep.subr.mxu0 0.0
  %460 = vmatpush1.msra.mxu0 0.0
  %461 = vmatprep.subr.mxu0 0.0
  %462 = vmatpush1.msra.mxu0 0.0
  %463 = vmatprep.subr.mxu0 0.0
  %464 = vmatpush1.msra.mxu0 0.0
  %465 = vmatprep.subr.mxu0 0.0
  %466 = vmatpush1.msra.mxu0 0.0
  %467 = vmatprep.subr.mxu0 0.0
  %468 = vmatpush1.msra.mxu0 0.0
  %469 = vmatprep.subr.mxu0 0.0
  %470 = vmatpush1.msra.mxu0 0.0
  %471 = vmatprep.mubr.f32.mxu0 0.0
  %472 = vmatmul.mubr.f32.gmra.mrb[0].mxu0 %v405
  %v473 = vpop.f32.mrb[0].mxu0
  %v474 = vadd.f32 %v402, %v473
  %v475 = vpop.f32.mrb[0].mxu0
  %476 = vdwg.mxu0
  %477 = vst [vmem:[%s9] sm:$0x1] %v474
  // Predicated region
  $region38: #{california_nn_forward.1} parent=0 // pred_check
    _
  $region39: #{california_nn_forward.1} parent=0 // pred_check_branch
    %479 = sbr.rel (0) target = $region41
  $region40: #{california_nn_forward.1} parent=0 // pred_region
    _
  $region41: #{california_nn_forward.1} parent=0 // pred_fallthru
    _
  // Predicated region
  $region42: #{california_nn_forward.1} parent=0 // pred_check
    _
  $region43: #{california_nn_forward.1} parent=0 // pred_check_branch
    %481 = sbr.rel (0) target = $region45
  $region44: #{california_nn_forward.1} parent=0 // pred_region
    _
  $region45: #{california_nn_forward.1} parent=0 // pred_fallthru
    _

</llo_original>
